<compile_context>
chip_gen: v7x
topology: tpu7x:2x2x1
jax: 0.10.0
libtpu: 0.0.40
codegen_flags: <defaults>
</compile_context>

<pallas_src>
import jax
import jax.numpy as jnp
from jax.experimental import pallas as pl
from jax.experimental.pallas import tpu as pltpu

# ----- static config (mirrors args.cnn_filter_sizes / args.cnn_num_filters) -----
FILTER_SIZES = (3, 4, 5)
NUM_FILTERS = 16
N_TOTAL = sum(FILTER_SIZES) * NUM_FILTERS          # 192: all taps of all banks
OUT_DIM = NUM_FILTERS * len(FILTER_SIZES)          # 48: logical output width
OUT_PAD = 128                                      # lane-dense output width


def cnn_kernel(ebd_ref, aux_ref, we_ref, wa_ref, b_ref, out_ref):
    """ebd_ref: (tb, T, d_ebd) f32; aux_ref: (tb, T, d_aux) f32;
    we_ref: (d_ebd, 192) bf16; wa_ref: (d_aux, 192) bf16;
    b_ref: (1, OUT_PAD) f32; out_ref: (tb, OUT_PAD) f32."""
    tb, t, d_ebd = ebd_ref.shape
    d_aux = aux_ref.shape[-1]

    # Cast f32 -> bf16 on the VPU right before the MXU (free; VALU is far from
    # saturated), avoiding a separate bf16 materialization pass over x in HBM.
    ebd = ebd_ref[...].astype(jnp.bfloat16).reshape(tb * t, d_ebd)
    aux = aux_ref[...].astype(jnp.bfloat16).reshape(tb * t, d_aux)

    # Two partial contractions over the channel split (ebd rows / aux rows of
    # W_cat); the [ebd|aux] concat never exists.  2-D MXU matmuls; the
    # flatten/unflatten reshapes only merge/split the sublane axis with T a
    # multiple of 8, so they are layout-preserving (no VMEM relayout copies).
    y = jax.lax.dot_general(ebd, we_ref[...], (((1,), (0,)), ((), ())),
                            preferred_element_type=jnp.float32)
    y = y + jax.lax.dot_general(aux, wa_ref[...], (((1,), (0,)), ((), ())),
                                preferred_element_type=jnp.float32)
    y = y.reshape(tb, t, N_TOTAL)                              # (tb, T, 192) f32

    # Per filter bank: K shifted VPU adds + max over time.  The 16-lane-wide
    # slices are second-order (DMA / step overhead are the binding resources);
    # revisit with pltpu.roll lane swizzles only if bundle dumps show VALU/XLU
    # as the limiter.
    pooled = []
    off = 0
    for K in FILTER_SIZES:
        L = t - K + 1                                          # valid conv length
        acc = y[:, 0:L, off:off + NUM_FILTERS]
        for k in range(1, K):
            acc = acc + y[:, k:k + L,
                          off + k * NUM_FILTERS:off + (k + 1) * NUM_FILTERS]
        pooled.append(jnp.max(acc, axis=1))                    # (tb, F)
        off += K * NUM_FILTERS

    # Lane-dense (tb, 128) slab: [pooled_3 | pooled_4 | pooled_5 | 0-pad].
    pad = jnp.zeros((tb, OUT_PAD - OUT_DIM), jnp.float32)
    slab = jnp.concatenate(pooled + [pad], axis=1)
    out_ref[...] = jnp.maximum(slab + b_ref[...], 0.0).astype(out_ref.dtype)


def _round_up(x, m):
    return ((x + m - 1) // m) * m


def _pick_batch_tile(B, T, C, batch_tile):
    """Pick the batch tile and a matching scoped-VMEM limit."""
    # Per-batch-row VMEM footprint (bytes): double-buffered f32 input blocks +
    # double-buffered output block + the f32 matmul temporary + bf16/pooling temps.
    per_row = (2 * T * C * 4            # ebd+aux blocks, double-buffered
               + 2 * OUT_PAD * 4        # output block, double-buffered
               + T * N_TOTAL * 4        # f32 y temporary
               + T * (C + N_TOTAL) * 2)  # bf16 casts / pooling temps (rough)
    budget = 44 * 1024 * 1024           # v7x-safe: well under 64 MiB per-TC VMEM
    tb_cap = max(8, (budget // per_row) // 8 * 8)
    if B <= batch_tile:
        tb = min(B, tb_cap)
    else:
        # Keep >= ~4 grid steps so the "parallel" batch axis gives both v7x
        # TensorCores several steps each; keep tb a multiple of 8 (dense sublanes).
        tb = max(8, min(batch_tile, tb_cap, _round_up(pl.cdiv(B, 4), 8)))
    vmem_bytes = int(min(max(32 * 1024 * 1024, 2 * tb * per_row),
                         60 * 1024 * 1024))
    return tb, vmem_bytes


def cnn_forward(ebd, aux, weights, biases, *, batch_tile=256, pad_output=False):
    """ebd: (B, T, d_ebd) f32; aux: (B, T, d_aux) f32 (the module's torch.cat of
    these two streams is done implicitly inside the kernel).
    weights[i]: (K_i, C, F) f32 (torch Conv1d (F, C, K) transposed); biases[i]: (F,)."""
    B, T, d_ebd = ebd.shape
    d_aux = aux.shape[-1]
    C = d_ebd + d_aux
    assert T >= max(FILTER_SIZES), "sequence shorter than the largest filter size"

    # Pack weights: (K, C, F) -> (C, K*F) per bank, concat over banks -> (C, 192),
    # then split by channel stream and cast the (tiny, VMEM-resident) matrices to bf16.
    w_cat = jnp.concatenate(
        [jnp.transpose(w, (1, 0, 2)).reshape(C, K * NUM_FILTERS)
         for K, w in zip(FILTER_SIZES, weights)],
        axis=1)
    w_ebd = w_cat[:d_ebd].astype(jnp.bfloat16)                 # (d_ebd, 192)
    w_aux = w_cat[d_ebd:].astype(jnp.bfloat16)                 # (d_aux, 192)
    # Pack biases into one lane-padded (1, 128) f32 vector.
    b_cat = jnp.zeros((1, OUT_PAD), jnp.float32).at[0, :OUT_DIM].set(
        jnp.concatenate(biases))

    tb, vmem_bytes = _pick_batch_tile(B, T, C, batch_tile)
    grid = (pl.cdiv(B, tb),)

    out = pl.pallas_call(
        cnn_kernel,
        out_shape=jax.ShapeDtypeStruct((B, OUT_PAD), jnp.float32),
        grid_spec=pltpu.PrefetchScalarGridSpec(
            num_scalar_prefetch=0,
            grid=grid,
            in_specs=[
                pl.BlockSpec((tb, T, d_ebd), lambda b: (b, 0, 0)),   # batch-tiled ebd
                pl.BlockSpec((tb, T, d_aux), lambda b: (b, 0, 0)),   # batch-tiled aux
                pl.BlockSpec((d_ebd, N_TOTAL), lambda b: (0, 0)),    # resident W (ebd rows)
                pl.BlockSpec((d_aux, N_TOTAL), lambda b: (0, 0)),    # resident W (aux rows)
                pl.BlockSpec((1, OUT_PAD), lambda b: (0, 0)),        # resident bias
            ],
            out_specs=pl.BlockSpec((tb, OUT_PAD), lambda b: (b, 0)), # lane-dense out
        ),
        compiler_params=pltpu.CompilerParams(
            dimension_semantics=("parallel",),      # shard batch across TensorCores
            vmem_limit_bytes=vmem_bytes,            # scales with tile, v7x-safe cap
        ),
    )(ebd, aux, w_ebd, w_aux, b_cat)
    # pad_output=True skips the slice pass and hands downstream the (B, 128) slab.
    return out if pad_output else out[:, :OUT_DIM]


def cnn_reference(ebd, aux, weights, biases):
    """Pure-JAX reference (torch Conv1d 'valid' + max_pool + relu), with the same
    bf16 quantization of x / weights as the kernel, accumulated in f32."""
    x = jnp.concatenate([ebd, aux], axis=2)
    xq = x.astype(jnp.bfloat16).astype(jnp.float32)
    B, T, _ = x.shape
    outs = []
    for K, w, b in zip(FILTER_SIZES, weights, biases):
        wq = w.astype(jnp.bfloat16).astype(jnp.float32)
        L = T - K + 1
        acc = jnp.zeros((B, L, NUM_FILTERS), jnp.float32)
        for k in range(K):
            acc = acc + jnp.einsum("blc,cf->blf", xq[:, k:k + L, :], wq[k])
        outs.append(jnp.max(acc, axis=1) + b[None, :])
    return jnp.maximum(jnp.concatenate(outs, axis=1), 0.0)


if __name__ == "__main__":
    # Small shapes consistent with the module's forward.
    T = 16
    D_EBD, D_AUX = 20, 12
    C = D_EBD + D_AUX                                          # input_dim

    key = jax.random.PRNGKey(0)
    k_ebd, k_aux, *k_w = jax.random.split(key, 2 + 2 * len(FILTER_SIZES))

    # Deterministic parameter init; torch Conv1d weight layout is (F, C, K),
    # transposed here to (K, C, F) for the channels-last matmul formulation.
    weights, biases = [], []
    for i, K in enumerate(FILTER_SIZES):
        w_torch_layout = 0.05 * jax.random.normal(
            k_w[2 * i], (NUM_FILTERS, C, K), jnp.float32)      # (F, C, K)
        weights.append(jnp.transpose(w_torch_layout, (2, 1, 0)))  # (K, C, F)
        biases.append(0.05 * jax.random.normal(
            k_w[2 * i + 1], (NUM_FILTERS,), jnp.float32))

    # TODO(synk): the aux embedding module (get_embedding(args)) is opaque here;
    # its output is modeled as a precomputed (B, T, d_aux) embedding tensor.
    def make_inputs(B, salt):
        kk = jax.random.fold_in(jax.random.PRNGKey(0), salt)
        ka, kb = jax.random.split(kk)
        return (jax.random.normal(ka, (B, T, D_EBD), jnp.float32),
                jax.random.normal(kb, (B, T, D_AUX), jnp.float32))

    # Case 1: tiny batch (single grid step, tb = B).
    ebd1, aux1 = make_inputs(2, 1)
    out1 = jax.block_until_ready(cnn_forward(ebd1, aux1, weights, biases))
    ref1 = cnn_reference(ebd1, aux1, weights, biases)
    assert out1.shape == (2, OUT_DIM)
    assert jnp.allclose(out1, ref1, atol=2e-3, rtol=2e-3), \
        float(jnp.max(jnp.abs(out1 - ref1)))

    # Case 2: B not divisible by the batch tile (exercises the partial final tile
    # and a multi-step grid, per the correctness-review recommendation).
    ebd2, aux2 = make_inputs(20, 2)
    out2 = jax.block_until_ready(
        cnn_forward(ebd2, aux2, weights, biases, batch_tile=8))
    ref2 = cnn_reference(ebd2, aux2, weights, biases)
    assert out2.shape == (20, OUT_DIM)
    assert jnp.allclose(out2, ref2, atol=2e-3, rtol=2e-3), \
        float(jnp.max(jnp.abs(out2 - ref2)))

    print("KERNEL_OK")
</pallas_src>

<mosaic_0001>
module attributes {stable_mosaic.version = 11 : i64} {
  func.func @cnn_kernel(%arg0: i32, %arg1: memref<2x16x20xf32, #tpu.memory_space<vmem>>, %arg2: memref<2x16x12xf32, #tpu.memory_space<vmem>>, %arg3: memref<20x192xbf16, #tpu.memory_space<vmem>>, %arg4: memref<12x192xbf16, #tpu.memory_space<vmem>>, %arg5: memref<1x128xf32, #tpu.memory_space<vmem>>, %arg6: memref<2x128xf32, #tpu.memory_space<vmem>>) attributes {dimension_semantics = [#tpu.dimension_semantics<parallel>], iteration_bounds = array<i64: 1>, scalar_prefetch = 0 : i64, scratch_operands = 0 : i64, tpu.core_type = #tpu.core_type<tc>, window_params = [{transform_indices = @transform_0, window_bounds = array<i64: 2, 16, 20>}, {transform_indices = @transform_1, window_bounds = array<i64: 2, 16, 12>}, {pipeline_mode = #tpu.pipeline_mode<synchronous>, transform_indices = @transform_2, window_bounds = array<i64: 20, 192>}, {pipeline_mode = #tpu.pipeline_mode<synchronous>, transform_indices = @transform_3, window_bounds = array<i64: 12, 192>}, {pipeline_mode = #tpu.pipeline_mode<synchronous>, transform_indices = @transform_4, window_bounds = array<i64: 1, 128>}, {transform_indices = @transform_5, window_bounds = array<i64: 2, 128>}]} {
    %c0 = arith.constant 0 : index
    %c0_0 = arith.constant 0 : index
    %c0_1 = arith.constant 0 : index
    %0 = vector.load %arg1[%c0, %c0_0, %c0_1] : memref<2x16x20xf32, #tpu.memory_space<vmem>>, vector<2x16x20xf32>
    %1 = arith.truncf %0 : vector<2x16x20xf32> to vector<2x16x20xbf16>
    %2 = vector.shape_cast %1 : vector<2x16x20xbf16> to vector<32x20xbf16>
    %c0_2 = arith.constant 0 : index
    %c0_3 = arith.constant 0 : index
    %c0_4 = arith.constant 0 : index
    %3 = vector.load %arg2[%c0_2, %c0_3, %c0_4] : memref<2x16x12xf32, #tpu.memory_space<vmem>>, vector<2x16x12xf32>
    %4 = arith.truncf %3 : vector<2x16x12xf32> to vector<2x16x12xbf16>
    %5 = vector.shape_cast %4 : vector<2x16x12xbf16> to vector<32x12xbf16>
    %c0_5 = arith.constant 0 : index
    %c0_6 = arith.constant 0 : index
    %6 = vector.load %arg3[%c0_5, %c0_6] : memref<20x192xbf16, #tpu.memory_space<vmem>>, vector<20x192xbf16>
    %cst = arith.constant dense<0.000000e+00> : vector<32x192xf32>
    %7 = tpu.matmul %2, %6, %cst {dimension_numbers = #tpu.dot_dimension_numbers<[1], [0], [0], [1], [0, 0, 1, 1], [], []>} : vector<32x20xbf16>, vector<20x192xbf16>, vector<32x192xf32> -> vector<32x192xf32>
    %c0_7 = arith.constant 0 : index
    %c0_8 = arith.constant 0 : index
    %8 = vector.load %arg4[%c0_7, %c0_8] : memref<12x192xbf16, #tpu.memory_space<vmem>>, vector<12x192xbf16>
    %cst_9 = arith.constant dense<0.000000e+00> : vector<32x192xf32>
    %9 = tpu.matmul %5, %8, %cst_9 {dimension_numbers = #tpu.dot_dimension_numbers<[1], [0], [0], [1], [0, 0, 1, 1], [], []>} : vector<32x12xbf16>, vector<12x192xbf16>, vector<32x192xf32> -> vector<32x192xf32>
    %10 = arith.addf %7, %9 : vector<32x192xf32>
    %11 = vector.shape_cast %10 : vector<32x192xf32> to vector<2x16x192xf32>
    %12 = vector.extract_strided_slice %11 {offsets = [0, 0, 0], sizes = [2, 14, 16], strides = [1, 1, 1]} : vector<2x16x192xf32> to vector<2x14x16xf32>
    %13 = vector.extract_strided_slice %11 {offsets = [0, 1, 16], sizes = [2, 14, 16], strides = [1, 1, 1]} : vector<2x16x192xf32> to vector<2x14x16xf32>
    %14 = arith.addf %12, %13 : vector<2x14x16xf32>
    %15 = vector.extract_strided_slice %11 {offsets = [0, 2, 32], sizes = [2, 14, 16], strides = [1, 1, 1]} : vector<2x16x192xf32> to vector<2x14x16xf32>
    %16 = arith.addf %14, %15 : vector<2x14x16xf32>
    %cst_10 = arith.constant dense<0xFF800000> : vector<2x16xf32>
    %17 = vector.multi_reduction <maximumf>, %16, %cst_10 [1] : vector<2x14x16xf32> to vector<2x16xf32>
    %18 = vector.extract_strided_slice %11 {offsets = [0, 0, 48], sizes = [2, 13, 16], strides = [1, 1, 1]} : vector<2x16x192xf32> to vector<2x13x16xf32>
    %19 = vector.extract_strided_slice %11 {offsets = [0, 1, 64], sizes = [2, 13, 16], strides = [1, 1, 1]} : vector<2x16x192xf32> to vector<2x13x16xf32>
    %20 = arith.addf %18, %19 : vector<2x13x16xf32>
    %21 = vector.extract_strided_slice %11 {offsets = [0, 2, 80], sizes = [2, 13, 16], strides = [1, 1, 1]} : vector<2x16x192xf32> to vector<2x13x16xf32>
    %22 = arith.addf %20, %21 : vector<2x13x16xf32>
    %23 = vector.extract_strided_slice %11 {offsets = [0, 3, 96], sizes = [2, 13, 16], strides = [1, 1, 1]} : vector<2x16x192xf32> to vector<2x13x16xf32>
    %24 = arith.addf %22, %23 : vector<2x13x16xf32>
    %cst_11 = arith.constant dense<0xFF800000> : vector<2x16xf32>
    %25 = vector.multi_reduction <maximumf>, %24, %cst_11 [1] : vector<2x13x16xf32> to vector<2x16xf32>
    %26 = vector.extract_strided_slice %11 {offsets = [0, 0, 112], sizes = [2, 12, 16], strides = [1, 1, 1]} : vector<2x16x192xf32> to vector<2x12x16xf32>
    %27 = vector.extract_strided_slice %11 {offsets = [0, 1, 128], sizes = [2, 12, 16], strides = [1, 1, 1]} : vector<2x16x192xf32> to vector<2x12x16xf32>
    %28 = arith.addf %26, %27 : vector<2x12x16xf32>
    %29 = vector.extract_strided_slice %11 {offsets = [0, 2, 144], sizes = [2, 12, 16], strides = [1, 1, 1]} : vector<2x16x192xf32> to vector<2x12x16xf32>
    %30 = arith.addf %28, %29 : vector<2x12x16xf32>
    %31 = vector.extract_strided_slice %11 {offsets = [0, 3, 160], sizes = [2, 12, 16], strides = [1, 1, 1]} : vector<2x16x192xf32> to vector<2x12x16xf32>
    %32 = arith.addf %30, %31 : vector<2x12x16xf32>
    %33 = vector.extract_strided_slice %11 {offsets = [0, 4, 176], sizes = [2, 12, 16], strides = [1, 1, 1]} : vector<2x16x192xf32> to vector<2x12x16xf32>
    %34 = arith.addf %32, %33 : vector<2x12x16xf32>
    %cst_12 = arith.constant dense<0xFF800000> : vector<2x16xf32>
    %35 = vector.multi_reduction <maximumf>, %34, %cst_12 [1] : vector<2x12x16xf32> to vector<2x16xf32>
    %cst_13 = arith.constant 0.000000e+00 : f32
    %36 = vector.broadcast %cst_13 : f32 to vector<2x80xf32>
    %37 = tpu.concatenate %17, %25, %35, %36 in 1 : vector<2x16xf32>, vector<2x16xf32>, vector<2x16xf32>, vector<2x80xf32> -> vector<2x128xf32>
    %c0_14 = arith.constant 0 : index
    %c0_15 = arith.constant 0 : index
    %38 = vector.load %arg5[%c0_14, %c0_15] : memref<1x128xf32, #tpu.memory_space<vmem>>, vector<1x128xf32>
    %39 = vector.broadcast %38 : vector<1x128xf32> to vector<2x128xf32>
    %40 = arith.addf %37, %39 : vector<2x128xf32>
    %cst_16 = arith.constant 0.000000e+00 : f32
    %41 = vector.broadcast %cst_16 : f32 to vector<2x128xf32>
    %42 = arith.maximumf %40, %41 : vector<2x128xf32>
    %c0_17 = arith.constant 0 : index
    %c0_18 = arith.constant 0 : index
    %43 = vector.load %arg6[%c0_17, %c0_18] : memref<2x128xf32, #tpu.memory_space<vmem>>, vector<2x128xf32>
    tpu.vector_store %arg6[%c0_17, %c0_18], %42 {strides = array<i32>} : memref<2x128xf32, #tpu.memory_space<vmem>>, vector<2x128xf32>,
    return
  }
  func.func @transform_0(%arg0: i32) -> (i32, i32, i32) {
    %c0_i32 = arith.constant 0 : i32
    %c0_i32_0 = arith.constant 0 : i32
    %c0_i32_1 = arith.constant 0 : i32
    return %arg0, %c0_i32, %c0_i32_0 : i32, i32, i32
  }
  func.func @transform_1(%arg0: i32) -> (i32, i32, i32) {
    %c0_i32 = arith.constant 0 : i32
    %c0_i32_0 = arith.constant 0 : i32
    %c0_i32_1 = arith.constant 0 : i32
    return %arg0, %c0_i32, %c0_i32_0 : i32, i32, i32
  }
  func.func @transform_2(%arg0: i32) -> (i32, i32) {
    %c0_i32 = arith.constant 0 : i32
    %c0_i32_0 = arith.constant 0 : i32
    %c0_i32_1 = arith.constant 0 : i32
    return %c0_i32, %c0_i32_0 : i32, i32
  }
  func.func @transform_3(%arg0: i32) -> (i32, i32) {
    %c0_i32 = arith.constant 0 : i32
    %c0_i32_0 = arith.constant 0 : i32
    %c0_i32_1 = arith.constant 0 : i32
    return %c0_i32, %c0_i32_0 : i32, i32
  }
  func.func @transform_4(%arg0: i32) -> (i32, i32) {
    %c0_i32 = arith.constant 0 : i32
    %c0_i32_0 = arith.constant 0 : i32
    %c0_i32_1 = arith.constant 0 : i32
    return %c0_i32, %c0_i32_0 : i32, i32
  }
  func.func @transform_5(%arg0: i32) -> (i32, i32) {
    %c0_i32 = arith.constant 0 : i32
    %c0_i32_0 = arith.constant 0 : i32
    return %arg0, %c0_i32 : i32, i32
  }
}

</mosaic_0001>

<llo_original>
// kernel: tpu_custom_call.1
$region0: #{tpu_custom_call.1}
  #allocation0 [shape = 'u32[]', space=smem, size = 0x4, offset = 0x4, fixed_abs, tag = 'smem constant byte address 0x4 - core index']
  #allocation1 [shape = 'u32[144,128]{1,0:T(1,128)}', space=vmem, size = 0x12000, scoped, tag = 'internal scratch']
  %s0 = inlined_call_operand.vmem [shape: f32[2,16,20], index: 0, kind: input, shape index: {}]
  %s1 = inlined_call_operand.vmem [shape: f32[2,16,12], index: 1, kind: input, shape index: {}]
  %s2 = inlined_call_operand.vmem [shape: bf16[20,192], index: 2, kind: input, shape index: {}]
  %s3 = inlined_call_operand.hbm [shape: bf16[12,192], index: 3, kind: input, shape index: {}]
  %s4 = inlined_call_operand.vmem [shape: f32[1,128], index: 4, kind: input, shape index: {}]
  %s5 = inlined_call_operand.hbm [shape: f32[2,128], index: 5, kind: output, shape index: {}]
  %s6 = sld [smem:[#allocation0]]
  $region34: #{tpu_custom_call.1} parent=0
    _
  %s8 = ssub.s32 1, %s6
  %s9 = scalar_select 0, %s8, %s6
  $region1: #{tpu_custom_call.1} parent=0
    #allocation2 [shape = 'u8[8192]{0}', space=vmem, size = 0x2000, scoped, tag = 'input window, operand 3, single buffered']
    #allocation3 [shape = 's32[1]{0}', space=sflag, size = 0x4, scoped, tag = 'scoped memory for tpu_custom_call.1']
    #allocation4 [shape = 's32[1]{0}', space=sflag, size = 0x4, scoped, tag = 'scoped memory for tpu_custom_call.1']
    #allocation5 [shape = 'u8[1024]{0}', space=vmem, size = 0x400, scoped, tag = 'output window, operand 0, single buffered']
    %10 = vsyncpa [#allocation3], 0
    %11 = vsyncpa [#allocation4], 0
    // Predicated region
    $region2: #{tpu_custom_call.1} parent=1 // pred_check
      _
    $region3: #{tpu_custom_call.1} parent=1 // pred_check_branch
      %13 = sbr.rel (0) target = $region5
    $region4: #{tpu_custom_call.1} parent=1 // pred_region
      _
    $region5: #{tpu_custom_call.1} parent=1 // pred_fallthru
      _
    // Predicated region
    $region6: #{tpu_custom_call.1} parent=1 // pred_check
      _
    $region7: #{tpu_custom_call.1} parent=1 // pred_check_branch
      %15 = sbr.rel (0) target = $region9
    $region8: #{tpu_custom_call.1} parent=1 // pred_region
      _
    $region9: #{tpu_custom_call.1} parent=1 // pred_fallthru
      _
    // Predicated region
    $region10: #{tpu_custom_call.1} parent=1 // pred_check
      _
    $region11: #{tpu_custom_call.1} parent=1 // pred_check_branch
      %17 = sbr.rel (0) target = $region13
    $region12: #{tpu_custom_call.1} parent=1 // pred_region
      _
    $region13: #{tpu_custom_call.1} parent=1 // pred_fallthru
      _
    // Predicated region
    $region14: #{tpu_custom_call.1} parent=1 // pred_check
      _
    $region15: #{tpu_custom_call.1} parent=1 // pred_check_branch
      %19 = sbr.rel (0) target = $region17
    $region16: #{tpu_custom_call.1} parent=1 // pred_region
      %s21 = ssub.s32 256, 256
      %22 = vsyncadd [#allocation3], %s21
      %s23 = sshll.u32 [#allocation2], 4
      %s24 = int_to_ptr.vmem [resolvable:$true] %s23
      %29 = dma.hbm_to_vmem [thread:$0]  %s3, 256, %s24, [#allocation3], 128, 128, 8
    $region17: #{tpu_custom_call.1} parent=1 // pred_fallthru
      _
    // Predicated region
    $region18: #{tpu_custom_call.1} parent=1 // pred_check
      _
    $region19: #{tpu_custom_call.1} parent=1 // pred_check_branch
      %31 = sbr.rel (0) target = $region21
    $region20: #{tpu_custom_call.1} parent=1 // pred_region
      _
    $region21: #{tpu_custom_call.1} parent=1 // pred_fallthru
      _
    // Predicated region
    $region22: #{tpu_custom_call.1} parent=1 // pred_check
      _
    $region23: #{tpu_custom_call.1} parent=1 // pred_check_branch
      %33 = sbr.rel (0) target = $region25
    $region24: #{tpu_custom_call.1} parent=1 // pred_region
      %34 = dma.done [#allocation3], 256
    $region25: #{tpu_custom_call.1} parent=1 // pred_fallthru
      _
    %v36 = vld [vmem:[%s0] sm:$0xff]
    %v37 = vld [vmem:[%s0 + $0x8] sm:$0xff]
    %v38 = vld [vmem:[%s0 + $0x10] sm:$0xff]
    %v39 = vld [vmem:[%s0 + $0x18] sm:$0xff]
    %v40 = vpack.c.bf16 %v37, %v36
    %v41 = vpack.c.bf16 %v39, %v38
    %v42 = vld [vmem:[%s1] sm:$0xff]
    %v43 = vld [vmem:[%s1 + $0x8] sm:$0xff]
    %v44 = vld [vmem:[%s1 + $0x10] sm:$0xff]
    %v45 = vld [vmem:[%s1 + $0x18] sm:$0xff]
    %v46 = vpack.c.bf16 %v43, %v42
    %v47 = vpack.c.bf16 %v45, %v44
    %v48 = vld [vmem:[%s2] sm:$0xff]
    %v49 = vld [vmem:[%s2 + $0x8] sm:$0xff]
    %v50 = vld [vmem:[%s2 + $0x10] sm:$0x33]
    %v51 = vld [vmem:[#allocation2] sm:$0xff]
    %v52 = vld [vmem:[#allocation2 + $0x8] sm:$0x33]
    %v55 = vunpack.c.l.b16 %v51
    %v56 = vunpack.c.h.b16 %v51
    %v57 = vunpack.c.l.b16 %v52
    %v58 = vunpack.c.h.b16 %v52
    %v59 = vpack.c.b16 %v57, %v55
    %v60 = vpack.c.b16 %v58, %v56
    %vm61 = vcmask 97280
    %v63 = vsel %vm61, %v46, 0
    %v66 = vsel %vm61, %v47, 0
    %vm68 = vcmask 1045504
    %v70 = vsel %vm68, %v59, 0
    %v73 = vsel %vm68, %v60, 0
    %75 = vmatprep.subr.bf16.mxu0 %v73
    %76 = vmatpush1.bf16.msra.mxu0 %v70
    %77 = vmatprep.subr.bf16.mxu0 0
    %78 = vmatpush1.bf16.msra.mxu0 0
    %79 = vmatprep.subr.bf16.mxu0 0
    %80 = vmatpush1.bf16.msra.mxu0 0
    %81 = vmatprep.subr.bf16.mxu0 0
    %82 = vmatpush1.bf16.msra.mxu0 0
    %83 = vmatprep.subr.bf16.mxu0 0
    %84 = vmatpush1.bf16.msra.mxu0 0
    %85 = vmatprep.subr.bf16.mxu0 0
    %86 = vmatpush1.bf16.msra.mxu0 0
    %87 = vmatprep.subr.bf16.mxu0 0
    %88 = vmatpush1.bf16.msra.mxu0 0
    %89 = vmatprep.subr.bf16.mxu0 0
    %90 = vmatpush1.bf16.msra.mxu0 0
    %91 = vmatprep.subr.bf16.mxu0 0
    %92 = vmatpush1.bf16.msra.mxu0 0
    %93 = vmatprep.subr.bf16.mxu0 0
    %94 = vmatpush1.bf16.msra.mxu0 0
    %95 = vmatprep.subr.bf16.mxu0 0
    %96 = vmatpush1.bf16.msra.mxu0 0
    %97 = vmatprep.subr.bf16.mxu0 0
    %98 = vmatpush1.bf16.msra.mxu0 0
    %99 = vmatprep.subr.bf16.mxu0 0
    %100 = vmatpush1.bf16.msra.mxu0 0
    %101 = vmatprep.subr.bf16.mxu0 0
    %102 = vmatpush1.bf16.msra.mxu0 0
    %103 = vmatprep.subr.bf16.mxu0 0
    %104 = vmatpush1.bf16.msra.mxu0 0
    %105 = vmatprep.subr.bf16.mxu0 0
    %106 = vmatpush1.bf16.msra.mxu0 0
    %107 = vmatprep.mubr.bf16.mxu0 0
    %108 = vmatmul.mubr.bf16.gmra.mrb[0].mxu0 %v63
    %v109 = vpop.f32.mrb[0].mxu0
    %v110 = vadd.f32 0.0, %v109
    %v111 = vpop.f32.mrb[0].mxu0
    %v112 = vadd.f32 0.0, %v111
    %v113 = vpop.f32.mrb[0].mxu0
    %v114 = vadd.f32 0.0, %v113
    %v115 = vpop.f32.mrb[0].mxu0
    %v116 = vadd.f32 0.0, %v115
    %117 = vmatprep.mubr.bf16.mxu0 0
    %118 = vmatmul.mubr.bf16.gmra.mrb[0].mxu0 %v66
    %v119 = vpop.f32.mrb[0].mxu0
    %v120 = vadd.f32 0.0, %v119
    %v121 = vpop.f32.mrb[0].mxu0
    %v122 = vadd.f32 0.0, %v121
    %v123 = vpop.f32.mrb[0].mxu0
    %v124 = vadd.f32 0.0, %v123
    %v125 = vpop.f32.mrb[0].mxu0
    %v126 = vadd.f32 0.0, %v125
    %127 = vdwg.mxu0
    %v131 = vunpack.c.l.b16 %v48
    %v132 = vunpack.c.h.b16 %v48
    %v133 = vunpack.c.l.b16 %v49
    %v134 = vunpack.c.h.b16 %v49
    %v135 = vunpack.c.l.b16 %v50
    %v136 = vunpack.c.h.b16 %v50
    %v137 = vpack.c.b16 %v133, %v131
    %v138 = vpack.c.b16 %v134, %v132
    %v139 = vpack.c.b16 %v135, %v135
    %v140 = vpack.c.b16 %v136, %v136
    %vm143 = vcmask 162816
    %v145 = vsel %vm143, %v40, 0
    %v148 = vsel %vm143, %v41, 0
    %vm150 = vcmask 1041408
    %v152 = vsel %vm150, %v139, 0
    %v155 = vsel %vm150, %v140, 0
    %157 = vmatprep.subr.bf16.mxu0 %v138
    %158 = vmatpush1.bf16.msra.mxu0 %v137
    %159 = vmatprep.subr.bf16.mxu0 %v155
    %160 = vmatpush1.bf16.msra.mxu0 %v152
    %161 = vmatprep.subr.bf16.mxu0 0
    %162 = vmatpush1.bf16.msra.mxu0 0
    %163 = vmatprep.subr.bf16.mxu0 0
    %164 = vmatpush1.bf16.msra.mxu0 0
    %165 = vmatprep.subr.bf16.mxu0 0
    %166 = vmatpush1.bf16.msra.mxu0 0
    %167 = vmatprep.subr.bf16.mxu0 0
    %168 = vmatpush1.bf16.msra.mxu0 0
    %169 = vmatprep.subr.bf16.mxu0 0
    %170 = vmatpush1.bf16.msra.mxu0 0
    %171 = vmatprep.subr.bf16.mxu0 0
    %172 = vmatpush1.bf16.msra.mxu0 0
    %173 = vmatprep.subr.bf16.mxu0 0
    %174 = vmatpush1.bf16.msra.mxu0 0
    %175 = vmatprep.subr.bf16.mxu0 0
    %176 = vmatpush1.bf16.msra.mxu0 0
    %177 = vmatprep.subr.bf16.mxu0 0
    %178 = vmatpush1.bf16.msra.mxu0 0
    %179 = vmatprep.subr.bf16.mxu0 0
    %180 = vmatpush1.bf16.msra.mxu0 0
    %181 = vmatprep.subr.bf16.mxu0 0
    %182 = vmatpush1.bf16.msra.mxu0 0
    %183 = vmatprep.subr.bf16.mxu0 0
    %184 = vmatpush1.bf16.msra.mxu0 0
    %185 = vmatprep.subr.bf16.mxu0 0
    %186 = vmatpush1.bf16.msra.mxu0 0
    %187 = vmatprep.subr.bf16.mxu0 0
    %188 = vmatpush1.bf16.msra.mxu0 0
    %189 = vmatprep.mubr.bf16.mxu0 0
    %190 = vmatmul.mubr.bf16.gmra.mrb[0].mxu0 %v145
    %v191 = vpop.f32.mrb[0].mxu0
    %v192 = vadd.f32 %v110, %v191
    %v193 = vpop.f32.mrb[0].mxu0
    %v194 = vadd.f32 %v112, %v193
    %v195 = vpop.f32.mrb[0].mxu0
    %v196 = vadd.f32 %v114, %v195
    %v197 = vpop.f32.mrb[0].mxu0
    %v198 = vadd.f32 %v116, %v197
    %199 = vmatprep.mubr.bf16.mxu0 0
    %200 = vmatmul.mubr.bf16.gmra.mrb[0].mxu0 %v148
    %v201 = vpop.f32.mrb[0].mxu0
    %v202 = vadd.f32 %v120, %v201
    %v203 = vpop.f32.mrb[0].mxu0
    %v204 = vadd.f32 %v122, %v203
    %v205 = vpop.f32.mrb[0].mxu0
    %v206 = vadd.f32 %v124, %v205
    %v207 = vpop.f32.mrb[0].mxu0
    %v208 = vadd.f32 %v126, %v207
    %209 = vdwg.mxu0
    %vm214 = vcmask 1046528
    %v215 = vrot.slane %v192, 1
    %v216 = vrot.slane %v196, 1
    %v217 = vsel %vm214, %v215, %v216
    %v218 = vrot.slane %v202, 1
    %v219 = vrot.slane %v206, 1
    %v220 = vsel %vm214, %v218, %v219
    %221 = vrot.lane.b32.xlu0 %v217, 112
    %v222 = vpop.permute.xlu0 %221
    %223 = vrot.lane.b32.xlu0 %v216, 112
    %v224 = vpop.permute.xlu0 %223
    %225 = vrot.lane.b32.xlu0 %v220, 112
    %v226 = vpop.permute.xlu0 %225
    %227 = vrot.lane.b32.xlu0 %v219, 112
    %v228 = vpop.permute.xlu0 %227
    %v233 = vadd.f32 %v192, %v222
    %v234 = vadd.f32 %v196, %v224
    %v235 = vadd.f32 %v202, %v226
    %v236 = vadd.f32 %v206, %v228
    %v237 = vrot.slane %v192, 2
    %v238 = vrot.slane %v196, 2
    %v239 = vsel %vm68, %v237, %v238
    %v240 = vrot.slane %v202, 2
    %v241 = vrot.slane %v206, 2
    %v242 = vsel %vm68, %v240, %v241
    %243 = vrot.lane.b32.xlu0 %v239, 96
    %v244 = vpop.permute.xlu0 %243
    %245 = vrot.lane.b32.xlu0 %v238, 96
    %v246 = vpop.permute.xlu0 %245
    %247 = vrot.lane.b32.xlu0 %v242, 96
    %v248 = vpop.permute.xlu0 %247
    %249 = vrot.lane.b32.xlu0 %v241, 96
    %v250 = vpop.permute.xlu0 %249
    %v255 = vadd.f32 %v233, %v244
    %v256 = vadd.f32 %v234, %v246
    %v257 = vadd.f32 %v235, %v248
    %v258 = vadd.f32 %v236, %v250
    %vm259 = vcmask 130048
    %v260 = vsel %vm259, %v255, -inf
    %vm261 = vcmask 128000
    %v262 = vsel %vm261, %v256, -inf
    %v263 = vmax.f32 %v260, %v262
    %v264 = vrot.slane %v263, 4
    %v265 = vmax.f32 %v263, %v264
    %v266 = vrot.slane %v265, 2
    %v267 = vmax.f32 %v265, %v266
    %v268 = vrot.slane %v267, 1
    %v269 = vmax.f32 %v267, %v268
    %v270 = vsel %vm259, %v257, -inf
    %v271 = vsel %vm261, %v258, -inf
    %v272 = vmax.f32 %v270, %v271
    %v273 = vrot.slane %v272, 4
    %v274 = vmax.f32 %v272, %v273
    %v275 = vrot.slane %v274, 2
    %v276 = vmax.f32 %v274, %v275
    %v277 = vrot.slane %v276, 1
    %v278 = vmax.f32 %v276, %v277
    %vm279 = vcmask 1044480
    %v280 = vrot.slane %v192, 3
    %v281 = vrot.slane %v196, 3
    %v282 = vsel %vm279, %v280, %v281
    %v283 = vrot.slane %v202, 3
    %v284 = vrot.slane %v206, 3
    %v285 = vsel %vm279, %v283, %v284
    %286 = vrot.lane.b32.xlu0 %v282, 80
    %v287 = vpop.permute.xlu0 %286
    %288 = vrot.lane.b32.xlu0 %v281, 80
    %v289 = vpop.permute.xlu0 %288
    %290 = vrot.lane.b32.xlu0 %v285, 80
    %v291 = vpop.permute.xlu0 %290
    %292 = vrot.lane.b32.xlu0 %v284, 80
    %v293 = vpop.permute.xlu0 %292
    %v298 = vadd.f32 %v255, %v287
    %v299 = vadd.f32 %v256, %v289
    %v300 = vadd.f32 %v257, %v291
    %v301 = vadd.f32 %v258, %v293
    %vm302 = vcmask 523648
    %v303 = vsel %vm302, %v298, -inf
    %vm304 = vcmask 520576
    %v305 = vsel %vm304, %v299, -inf
    %v306 = vmax.f32 %v303, %v305
    %v307 = vrot.slane %v306, 4
    %v308 = vmax.f32 %v306, %v307
    %v309 = vrot.slane %v308, 2
    %v310 = vmax.f32 %v308, %v309
    %v311 = vrot.slane %v310, 1
    %v312 = vmax.f32 %v310, %v311
    %v313 = vsel %vm302, %v300, -inf
    %v314 = vsel %vm304, %v301, -inf
    %v315 = vmax.f32 %v313, %v314
    %v316 = vrot.slane %v315, 4
    %v317 = vmax.f32 %v315, %v316
    %v318 = vrot.slane %v317, 2
    %v319 = vmax.f32 %v317, %v318
    %v320 = vrot.slane %v319, 1
    %v321 = vmax.f32 %v319, %v320
    %v326 = vrot.slane %v194, 1
    %v327 = vrot.slane %v198, 1
    %v328 = vsel %vm214, %v326, %v327
    %v329 = vrot.slane %v204, 1
    %v330 = vrot.slane %v208, 1
    %v331 = vsel %vm214, %v329, %v330
    %332 = vrot.lane.b32.xlu0 %v328, 112
    %v333 = vpop.permute.xlu0 %332
    %334 = vrot.lane.b32.xlu0 %v327, 112
    %v335 = vpop.permute.xlu0 %334
    %336 = vrot.lane.b32.xlu0 %v331, 112
    %v337 = vpop.permute.xlu0 %336
    %338 = vrot.lane.b32.xlu0 %v330, 112
    %v339 = vpop.permute.xlu0 %338
    %v344 = vadd.f32 %v192, %v333
    %v345 = vadd.f32 %v196, %v335
    %v346 = vadd.f32 %v202, %v337
    %v347 = vadd.f32 %v206, %v339
    %v348 = vrot.slane %v194, 2
    %v349 = vrot.slane %v198, 2
    %v350 = vsel %vm68, %v348, %v349
    %v351 = vrot.slane %v204, 2
    %v352 = vrot.slane %v208, 2
    %v353 = vsel %vm68, %v351, %v352
    %354 = vrot.lane.b32.xlu0 %v350, 96
    %v355 = vpop.permute.xlu0 %354
    %356 = vrot.lane.b32.xlu0 %v349, 96
    %v357 = vpop.permute.xlu0 %356
    %358 = vrot.lane.b32.xlu0 %v353, 96
    %v359 = vpop.permute.xlu0 %358
    %360 = vrot.lane.b32.xlu0 %v352, 96
    %v361 = vpop.permute.xlu0 %360
    %v366 = vadd.f32 %v344, %v355
    %v367 = vadd.f32 %v345, %v357
    %v368 = vadd.f32 %v346, %v359
    %v369 = vadd.f32 %v347, %v361
    %v370 = vrot.slane %v194, 3
    %v371 = vrot.slane %v198, 3
    %v372 = vsel %vm279, %v370, %v371
    %v373 = vrot.slane %v204, 3
    %v374 = vrot.slane %v208, 3
    %v375 = vsel %vm279, %v373, %v374
    %376 = vrot.lane.b32.xlu0 %v372, 80
    %v377 = vpop.permute.xlu0 %376
    %378 = vrot.lane.b32.xlu0 %v371, 80
    %v379 = vpop.permute.xlu0 %378
    %380 = vrot.lane.b32.xlu0 %v375, 80
    %v381 = vpop.permute.xlu0 %380
    %382 = vrot.lane.b32.xlu0 %v374, 80
    %v383 = vpop.permute.xlu0 %382
    %v388 = vadd.f32 %v366, %v377
    %v389 = vadd.f32 %v367, %v379
    %v390 = vadd.f32 %v368, %v381
    %v391 = vadd.f32 %v369, %v383
    %vm392 = vcmask 1043456
    %v393 = vrot.slane %v194, 4
    %v394 = vrot.slane %v198, 4
    %v395 = vsel %vm392, %v393, %v394
    %v396 = vrot.slane %v204, 4
    %v397 = vrot.slane %v208, 4
    %v398 = vsel %vm392, %v396, %v397
    %399 = vrot.lane.b32.xlu0 %v395, 64
    %v400 = vpop.permute.xlu0 %399
    %401 = vrot.lane.b32.xlu0 %v394, 64
    %v402 = vpop.permute.xlu0 %401
    %403 = vrot.lane.b32.xlu0 %v398, 64
    %v404 = vpop.permute.xlu0 %403
    %405 = vrot.lane.b32.xlu0 %v397, 64
    %v406 = vpop.permute.xlu0 %405
    %v411 = vadd.f32 %v388, %v400
    %v412 = vadd.f32 %v389, %v402
    %v413 = vadd.f32 %v390, %v404
    %v414 = vadd.f32 %v391, %v406
    %vm415 = vcmask 1048448
    %v416 = vsel %vm415, %v411, -inf
    %vm417 = vcmask 1044352
    %v418 = vsel %vm417, %v412, -inf
    %v419 = vmax.f32 %v416, %v418
    %v420 = vrot.slane %v419, 4
    %v421 = vmax.f32 %v419, %v420
    %v422 = vrot.slane %v421, 2
    %v423 = vmax.f32 %v421, %v422
    %v424 = vrot.slane %v423, 1
    %v425 = vmax.f32 %v423, %v424
    %v426 = vsel %vm415, %v413, -inf
    %v427 = vsel %vm417, %v414, -inf
    %v428 = vmax.f32 %v426, %v427
    %v429 = vrot.slane %v428, 4
    %v430 = vmax.f32 %v428, %v429
    %v431 = vrot.slane %v430, 2
    %v432 = vmax.f32 %v430, %v431
    %v433 = vrot.slane %v432, 1
    %v434 = vmax.f32 %v432, %v433
    %vm437 = vcmask 1041409
    %v438 = vsel %vm437, %v278, %v269
    %v442 = vsel %vm437, %v321, %v312
    %443 = vrot.lane.b32.xlu0 %v442, 96
    %v444 = vpop.permute.xlu0 %443
    %v448 = vsel %vm437, %v434, %v425
    %449 = vrot.lane.b32.xlu0 %v448, 48
    %v450 = vpop.permute.xlu0 %449
    %v452 = vsel %vm259, %v438, %v444
    %vm453 = vcmask 261120
    %v454 = vsel %vm453, %v452, %v450
    %vm455 = vcmask 392192
    %v456 = vsel %vm455, %v454, 0.0
    %v457 = vld [vmem:[%s4] sm:$0x1]
    %v459 = vlaneseq
    %v460 = vshrl.u32 %v459, 7
    %v461 = vsub.s32 0, %v460
    %v462 = vrot.slane %v457, %v461
    %v464 = vadd.f32 %v456, %v462
    %v465 = vmax.f32 %v464, 0.0
    %466 = vst [vmem:[#allocation5] sm:$0x3] %v465
    // Predicated region
    $region26: #{tpu_custom_call.1} parent=1 // pred_check
      _
    $region27: #{tpu_custom_call.1} parent=1 // pred_check_branch
      %468 = sbr.rel (0) target = $region29
    $region28: #{tpu_custom_call.1} parent=1 // pred_region
      %s470 = ssub.s32 32, 32
      %471 = vsyncadd [#allocation4], %s470
      %s473 = sshll.u32 [#allocation5], 4
      %s474 = int_to_ptr.vmem [resolvable:$true] %s473
      %476 = dma.vmem_to_hbm [thread:$0]  %s474, 32, %s5, [#allocation4]
    $region29: #{tpu_custom_call.1} parent=1 // pred_fallthru
      _
    // Predicated region
    $region30: #{tpu_custom_call.1} parent=1 // pred_check
      _
    $region31: #{tpu_custom_call.1} parent=1 // pred_check_branch
      %478 = sbr.rel (0) target = $region33
    $region32: #{tpu_custom_call.1} parent=1 // pred_region
      %479 = dma.done [#allocation4], 32
    $region33: #{tpu_custom_call.1} parent=1 // pred_fallthru
      _
    %480 = vsyncpa [#allocation3], 1
    %481 = vsyncpa [#allocation4], 1

</llo_original>
